<compile_context>
chip_gen: v5e
topology: v5e:2x2
jax: 0.10.0
libtpu: 0.0.40
codegen_flags: <defaults>
</compile_context>

<pallas_src>
import functools

import jax
import jax.numpy as jnp
import numpy as np
from jax.experimental import pallas as pl
from jax.experimental.pallas import tpu as pltpu

KERNEL_SIZE = 25                 # fixed in Model.__init__
HALF = (KERNEL_SIZE - 1) // 2    # 12  (replicate-padding amount on each side)


@functools.lru_cache(maxsize=None)
def build_moving_avg_matrix(seq_len):
    """(T, T) matrix A such that  trend = A @ x  along the time axis
    reproduces moving_avg(kernel_size=25, stride=1) with replicate padding."""
    A = np.zeros((seq_len, seq_len), dtype=np.float32)
    inv = 1.0 / KERNEL_SIZE
    for t in range(seq_len):
        for k in range(KERNEL_SIZE):
            s = min(max(t + k - HALF, 0), seq_len - 1)   # replicate padding
            A[t, s] += inv
    return A


def trend_kernel(w_ref, b_ref, x_ref, o_ref):
    """o[b, p, c] = sum_t w[p, t] * x[b, t, c] + bias[p]

    w_ref: (P, T)        folded weight  (Linear_Trend[-pred_len:] @ A)
    b_ref: (P, 1)        bias column
    x_ref: (TB, T, C)    per-batch input tile (natural x_enc layout)
    o_ref: (TB, P, C)    per-batch output tile (natural output layout)
    """
    w = w_ref[...]                                                   # (P, T)
    # Hoist the bias broadcast out of the batch loop (no CSE on broadcasts).
    b = jnp.broadcast_to(b_ref[...], (o_ref.shape[1], o_ref.shape[2]))
    # Static unroll over the (small) batch tile: each step is one MXU matmul
    # (P, T) @ (T, C) with C on the lanes of the RHS -- no on-chip transpose
    # of x is needed because T is already the sublane axis of each x[i].
    for i in range(x_ref.shape[0]):
        o_ref[i] = jnp.dot(w, x_ref[i],
                           preferred_element_type=jnp.float32) + b


@functools.partial(jax.jit, static_argnames=("pred_len",))
def model_forward(x_enc, w_trend, b_trend, pred_len):
    """Equivalent of Model.forward(...) for long_term_forecast (individual=False).

    x_enc:   (B, seq_len, C) float32
    w_trend: (pred_len+seq_len, seq_len)   -- nn.Linear weight (PyTorch layout)
    b_trend: (pred_len+seq_len,)           -- nn.Linear bias
    returns: (B, pred_len, C)
    """
    B, T, C = x_enc.shape
    x_enc = x_enc.astype(jnp.float32)

    # --- fold moving average into the weight; keep only the surviving rows ---
    A = jnp.asarray(build_moving_avg_matrix(T))                    # (T, T)
    w_eff = (w_trend[-pred_len:, :].astype(jnp.float32) @ A)       # (P, T)
    b_eff = b_trend[-pred_len:].astype(jnp.float32).reshape(pred_len, 1)

    # --- batch tiling: always tiled, padded to a multiple of TB ---------------
    # TB=8 once B>=16 keeps >=2 grid steps (shards across v7x's 2 TensorCores)
    # while keeping per-step VMEM small; tiny batches use a single block.
    TB = 8 if B >= 16 else max(B, 1)
    Bp = ((B + TB - 1) // TB) * TB
    x_in = x_enc if Bp == B else jnp.pad(
        x_enc, ((0, Bp - B), (0, 0), (0, 0)))
    grid = (Bp // TB,)

    out = pl.pallas_call(
        trend_kernel,
        out_shape=jax.ShapeDtypeStruct((Bp, pred_len, C), jnp.float32),
        grid=grid,
        in_specs=[
            pl.BlockSpec((pred_len, T), lambda i: (0, 0)),   # weight: VMEM-resident
            pl.BlockSpec((pred_len, 1), lambda i: (0, 0)),   # bias
            pl.BlockSpec((TB, T, C), lambda i: (i, 0, 0)),   # batch-tiled input
        ],
        out_specs=pl.BlockSpec((TB, pred_len, C), lambda i: (i, 0, 0)),
        compiler_params=pltpu.CompilerParams(
            dimension_semantics=("parallel",)),
    )(w_eff, b_eff, x_in)

    return out[:B] if Bp != B else out


def reference_forward(x_enc, w_trend, b_trend, pred_len):
    """Pure-JAX reference mirroring the PyTorch code path that reaches the output."""
    B, T, C = x_enc.shape
    front = jnp.repeat(x_enc[:, 0:1, :], HALF, axis=1)
    end = jnp.repeat(x_enc[:, -1:, :], HALF, axis=1)
    padded = jnp.concatenate([front, x_enc, end], axis=1)     # (B, T+2*HALF, C)
    trend = jnp.mean(
        jnp.stack([padded[:, k:k + T, :] for k in range(KERNEL_SIZE)], axis=0),
        axis=0)                                               # (B, T, C)
    trend_perm = jnp.transpose(trend, (0, 2, 1))              # (B, C, T)
    out = trend_perm @ w_trend.T + b_trend                    # (B, C, L)
    out = jnp.transpose(out, (0, 2, 1))                       # (B, L, C)
    return out[:, -pred_len:, :]


def _run_case(B, seq_len, pred_len, C, seed):
    L = pred_len + seq_len
    key = jax.random.PRNGKey(seed)
    k_x, k_w, k_b = jax.random.split(key, 3)

    x_enc = jax.random.normal(k_x, (B, seq_len, C), dtype=jnp.float32)
    bound = 1.0 / np.sqrt(seq_len)
    w_trend = jax.random.uniform(k_w, (L, seq_len), jnp.float32, -bound, bound)
    b_trend = jax.random.uniform(k_b, (L,), jnp.float32, -bound, bound)

    out = model_forward(x_enc, w_trend, b_trend, pred_len)
    out = jax.block_until_ready(out)

    ref = reference_forward(x_enc, w_trend, b_trend, pred_len)
    np.testing.assert_allclose(np.asarray(out), np.asarray(ref),
                               rtol=1e-4, atol=1e-5)
    assert out.shape == (B, pred_len, C)


if __name__ == "__main__":
    # Small shapes consistent with the module's forward
    # (x_mark_enc / x_dec / x_mark_dec do not influence the returned value).
    _run_case(B=2, seq_len=16, pred_len=8, C=4, seed=0)
    # Larger case: batch-tiled (TB=8, grid=(4,), "parallel") path.
    _run_case(B=32, seq_len=96, pred_len=24, C=16, seed=1)
    # Non-multiple batch + narrow channel count: exercises batch padding and
    # masked-lane stores.
    _run_case(B=18, seq_len=96, pred_len=24, C=7, seed=2)

    # TODO(synk): the dead TimesBlock / DataEmbedding / projection branch in
    # forecast() never affects the returned tensor and its helper classes are
    # not provided, so it is not reproduced here.
    print("KERNEL_OK")
</pallas_src>

<mosaic_0001>
module attributes {stable_mosaic.version = 11 : i64} {
  func.func @trend_kernel(%arg0: i32, %arg1: memref<8x16xf32, #tpu.memory_space<vmem>>, %arg2: memref<8x1xf32, #tpu.memory_space<vmem>>, %arg3: memref<2x16x4xf32, #tpu.memory_space<vmem>>, %arg4: memref<2x8x4xf32, #tpu.memory_space<vmem>>) attributes {dimension_semantics = [#tpu.dimension_semantics<parallel>], iteration_bounds = array<i64: 1>, scalar_prefetch = 0 : i64, scratch_operands = 0 : i64, tpu.core_type = #tpu.core_type<tc>, window_params = [{pipeline_mode = #tpu.pipeline_mode<synchronous>, transform_indices = @transform_0, window_bounds = array<i64: 8, 16>}, {pipeline_mode = #tpu.pipeline_mode<synchronous>, transform_indices = @transform_1, window_bounds = array<i64: 8, 1>}, {transform_indices = @transform_2, window_bounds = array<i64: 2, 16, 4>}, {transform_indices = @transform_3, window_bounds = array<i64: 2, 8, 4>}]} {
    %c0 = arith.constant 0 : index
    %c0_0 = arith.constant 0 : index
    %0 = vector.load %arg1[%c0, %c0_0] : memref<8x16xf32, #tpu.memory_space<vmem>>, vector<8x16xf32>
    %c0_1 = arith.constant 0 : index
    %c0_2 = arith.constant 0 : index
    %1 = vector.load %arg2[%c0_1, %c0_2] : memref<8x1xf32, #tpu.memory_space<vmem>>, vector<8x1xf32>
    %2 = vector.shape_cast %1 : vector<8x1xf32> to vector<8x1xf32>
    %3 = vector.broadcast %2 : vector<8x1xf32> to vector<8x4xf32>
    %c0_3 = arith.constant 0 : index
    %c0_4 = arith.constant 0 : index
    %c0_5 = arith.constant 0 : index
    %4 = vector.load %arg3[%c0_3, %c0_4, %c0_5] : memref<2x16x4xf32, #tpu.memory_space<vmem>>, vector<1x16x4xf32>
    %5 = vector.shape_cast %4 : vector<1x16x4xf32> to vector<16x4xf32>
    %cst = arith.constant dense<0.000000e+00> : vector<8x4xf32>
    %6 = tpu.matmul %0, %5, %cst {dimension_numbers = #tpu.dot_dimension_numbers<[1], [0], [0], [1], [0, 0, 1, 1], [], []>} : vector<8x16xf32>, vector<16x4xf32>, vector<8x4xf32> -> vector<8x4xf32>
    %7 = arith.addf %6, %3 : vector<8x4xf32>
    %c0_6 = arith.constant 0 : index
    %c0_7 = arith.constant 0 : index
    %c0_8 = arith.constant 0 : index
    %8 = vector.load %arg4[%c0_6, %c0_7, %c0_8] : memref<2x8x4xf32, #tpu.memory_space<vmem>>, vector<1x8x4xf32>
    %9 = vector.shape_cast %8 : vector<1x8x4xf32> to vector<8x4xf32>
    %10 = vector.shape_cast %7 : vector<8x4xf32> to vector<1x8x4xf32>
    tpu.vector_store %arg4[%c0_6, %c0_7, %c0_8], %10 {strides = array<i32>} : memref<2x8x4xf32, #tpu.memory_space<vmem>>, vector<1x8x4xf32>,
    %c1 = arith.constant 1 : index
    %c0_9 = arith.constant 0 : index
    %c0_10 = arith.constant 0 : index
    %11 = vector.load %arg3[%c1, %c0_9, %c0_10] : memref<2x16x4xf32, #tpu.memory_space<vmem>>, vector<1x16x4xf32>
    %12 = vector.shape_cast %11 : vector<1x16x4xf32> to vector<16x4xf32>
    %cst_11 = arith.constant dense<0.000000e+00> : vector<8x4xf32>
    %13 = tpu.matmul %0, %12, %cst_11 {dimension_numbers = #tpu.dot_dimension_numbers<[1], [0], [0], [1], [0, 0, 1, 1], [], []>} : vector<8x16xf32>, vector<16x4xf32>, vector<8x4xf32> -> vector<8x4xf32>
    %14 = arith.addf %13, %3 : vector<8x4xf32>
    %c1_12 = arith.constant 1 : index
    %c0_13 = arith.constant 0 : index
    %c0_14 = arith.constant 0 : index
    %15 = vector.load %arg4[%c1_12, %c0_13, %c0_14] : memref<2x8x4xf32, #tpu.memory_space<vmem>>, vector<1x8x4xf32>
    %16 = vector.shape_cast %15 : vector<1x8x4xf32> to vector<8x4xf32>
    %17 = vector.shape_cast %14 : vector<8x4xf32> to vector<1x8x4xf32>
    tpu.vector_store %arg4[%c1_12, %c0_13, %c0_14], %17 {strides = array<i32>} : memref<2x8x4xf32, #tpu.memory_space<vmem>>, vector<1x8x4xf32>,
    return
  }
  func.func @transform_0(%arg0: i32) -> (i32, i32) {
    %c0_i32 = arith.constant 0 : i32
    %c0_i32_0 = arith.constant 0 : i32
    %c0_i32_1 = arith.constant 0 : i32
    return %c0_i32, %c0_i32_0 : i32, i32
  }
  func.func @transform_1(%arg0: i32) -> (i32, i32) {
    %c0_i32 = arith.constant 0 : i32
    %c0_i32_0 = arith.constant 0 : i32
    %c0_i32_1 = arith.constant 0 : i32
    return %c0_i32, %c0_i32_0 : i32, i32
  }
  func.func @transform_2(%arg0: i32) -> (i32, i32, i32) {
    %c0_i32 = arith.constant 0 : i32
    %c0_i32_0 = arith.constant 0 : i32
    %c0_i32_1 = arith.constant 0 : i32
    return %arg0, %c0_i32, %c0_i32_0 : i32, i32, i32
  }
  func.func @transform_3(%arg0: i32) -> (i32, i32, i32) {
    %c0_i32 = arith.constant 0 : i32
    %c0_i32_0 = arith.constant 0 : i32
    %c0_i32_1 = arith.constant 0 : i32
    return %arg0, %c0_i32, %c0_i32_0 : i32, i32, i32
  }
}

</mosaic_0001>

<llo_original>
// kernel: model_forward.1
$region0: #{model_forward.1}
  #allocation0 [shape = 'u32[]', space=smem, size = 0x4, offset = 0x4, fixed_abs, tag = 'smem constant byte address 0x4 - core index']
  #allocation1 [shape = 'u32[72,128]{1,0:T(1,128)}', space=vmem, size = 0x9000, scoped, tag = 'internal scratch']
  %s0 = inlined_call_operand.vmem [shape: f32[8,16], index: 0, kind: input, shape index: {}]
  %s1 = inlined_call_operand.vmem [shape: f32[8,1], index: 1, kind: input, shape index: {}]
  %s2 = inlined_call_operand.vmem [shape: f32[2,16,4], index: 2, kind: input, shape index: {}]
  %s3 = inlined_call_operand.vmem [shape: f32[2,8,4], index: 3, kind: output, shape index: {}]
  %s4 = sld [smem:[#allocation0]]
  $region22: #{model_forward.1} parent=0
    _
  %s6 = ssub.s32 1, %s4
  %s7 = scalar_select 0, %s6, %s4
  // Predicated region
  $region2: #{model_forward.1} parent=0 // pred_check
    _
  $region3: #{model_forward.1} parent=0 // pred_check_branch
    %9 = sbr.rel (0) target = $region5
  $region4: #{model_forward.1} parent=0 // pred_region
    _
  $region5: #{model_forward.1} parent=0 // pred_fallthru
    _
  // Predicated region
  $region6: #{model_forward.1} parent=0 // pred_check
    _
  $region7: #{model_forward.1} parent=0 // pred_check_branch
    %11 = sbr.rel (0) target = $region9
  $region8: #{model_forward.1} parent=0 // pred_region
    _
  $region9: #{model_forward.1} parent=0 // pred_fallthru
    _
  // Predicated region
  $region10: #{model_forward.1} parent=0 // pred_check
    _
  $region11: #{model_forward.1} parent=0 // pred_check_branch
    %13 = sbr.rel (0) target = $region13
  $region12: #{model_forward.1} parent=0 // pred_region
    _
  $region13: #{model_forward.1} parent=0 // pred_fallthru
    _
  %v14 = vld [vmem:[%s0] sm:$0xff]
  %v15 = vld [vmem:[%s1] sm:$0xff]
  %17 = vset.pattern.permute.xlu0 0
  %18 = vperm.xlu0 %17, %v15
  %v19 = vpop.permute.xlu0 %18
  %v21 = vld [vmem:[%s2] sm:$0xff]
  %v22 = vld [vmem:[%s2 + $0x8] sm:$0xff]
  %vm23 = vcmask 130048
  %v25 = vsel %vm23, %v14, 0
  %27 = vmatpush.msra.mxu0 0.0
  %28 = vmatpush.msra.mxu0 0.0
  %29 = vmatpush.msra.mxu0 0.0
  %30 = vmatpush.msra.mxu0 0.0
  %31 = vmatpush.msra.mxu0 0.0
  %32 = vmatpush.msra.mxu0 0.0
  %33 = vmatpush.msra.mxu0 0.0
  %34 = vmatpush.msra.mxu0 0.0
  %35 = vmatpush.msra.mxu0 0.0
  %36 = vmatpush.msra.mxu0 0.0
  %37 = vmatpush.msra.mxu0 0.0
  %38 = vmatpush.msra.mxu0 0.0
  %39 = vmatpush.msra.mxu0 0.0
  %40 = vmatpush.msra.mxu0 0.0
  %41 = vmatpush.msra.mxu0 %v22
  %42 = vmatpush.msra.mxu0 %v21
  %43 = vmatmul.f32.gmra.mxu0 %v25
  %v44 = vpop.f32.mrf.mxu0
  %v45 = vadd.f32 %v19, %v44
  %46 = vdwg.mxu0
  %vm47 = vcmask 31744
  %48 = vst.msk [vmem:[%s3] sm:$0xff] %vm47, %v45
  %s49 = scalar_lea.vmem %s2, 16
  %v50 = vld [vmem:[%s49] sm:$0xff]
  %v51 = vld [vmem:[%s49 + $0x8] sm:$0xff]
  %52 = vmatpush.msra.mxu0 0.0
  %53 = vmatpush.msra.mxu0 0.0
  %54 = vmatpush.msra.mxu0 0.0
  %55 = vmatpush.msra.mxu0 0.0
  %56 = vmatpush.msra.mxu0 0.0
  %57 = vmatpush.msra.mxu0 0.0
  %58 = vmatpush.msra.mxu0 0.0
  %59 = vmatpush.msra.mxu0 0.0
  %60 = vmatpush.msra.mxu0 0.0
  %61 = vmatpush.msra.mxu0 0.0
  %62 = vmatpush.msra.mxu0 0.0
  %63 = vmatpush.msra.mxu0 0.0
  %64 = vmatpush.msra.mxu0 0.0
  %65 = vmatpush.msra.mxu0 0.0
  %66 = vmatpush.msra.mxu0 %v51
  %67 = vmatpush.msra.mxu0 %v50
  %68 = vmatmul.f32.gmra.mxu0 %v25
  %v69 = vpop.f32.mrf.mxu0
  %v70 = vadd.f32 %v19, %v69
  %71 = vdwg.mxu0
  %s72 = scalar_lea.vmem %s3, 8
  %73 = vst.msk [vmem:[%s72] sm:$0xff] %vm47, %v70
  // Predicated region
  $region14: #{model_forward.1} parent=0 // pred_check
    _
  $region15: #{model_forward.1} parent=0 // pred_check_branch
    %75 = sbr.rel (0) target = $region17
  $region16: #{model_forward.1} parent=0 // pred_region
    _
  $region17: #{model_forward.1} parent=0 // pred_fallthru
    _
  // Predicated region
  $region18: #{model_forward.1} parent=0 // pred_check
    _
  $region19: #{model_forward.1} parent=0 // pred_check_branch
    %77 = sbr.rel (0) target = $region21
  $region20: #{model_forward.1} parent=0 // pred_region
    _
  $region21: #{model_forward.1} parent=0 // pred_fallthru
    _

</llo_original>
